<compile_context>
chip_gen: v7x
topology: tpu7x:2x2x1
jax: 0.10.0
libtpu: 0.0.40
codegen_flags: <defaults>
</compile_context>

<pallas_src>
import functools

import jax
import jax.numpy as jnp
from jax.experimental import pallas as pl
from jax.experimental.pallas import tpu as pltpu

NEG_SLOPE = 0.01  # nn.LeakyReLU() default negative_slope


def _leaky_relu(x):
    return jnp.where(x >= 0, x, NEG_SLOPE * x)


def _round_up(x, m):
    return ((x + m - 1) // m) * m


def _choose_batch_tile(B, target=512):
    """Pick a batch tile: big (MXU/HBM efficiency), multiple of 8, and when the
    batch is small, split into >=2 grid steps so both v7x TensorCores get work."""
    b8 = _round_up(B, 8)
    if b8 <= 8:
        return 8
    if b8 <= target:
        return _round_up(pl.cdiv(b8, 2), 8)
    return target


def uplift_kernel(x_ref, w1_ref, b1_ref, w2_ref, b2_ref, w3_ref, b3_ref, o_ref):
    # Three bf16 MXU matmuls with f32 accumulation; bias add + LeakyReLU in f32.
    x = x_ref[...]  # bf16 (tile, in)
    h = jnp.dot(x, w1_ref[...], preferred_element_type=jnp.float32) + b1_ref[...]
    h = _leaky_relu(h)
    h = jnp.dot(h.astype(jnp.bfloat16), w2_ref[...],
                preferred_element_type=jnp.float32) + b2_ref[...]
    h = _leaky_relu(h)
    y = jnp.dot(h.astype(jnp.bfloat16), w3_ref[...],
                preferred_element_type=jnp.float32) + b3_ref[...]
    o_ref[...] = y.astype(o_ref.dtype)


@functools.partial(jax.jit, static_argnames=("batch_tile",))
def uplift_net_forward(x, params, batch_tile=None):
    """x: (B, input_size) float32. params: dict of w1,b1,w2,b2,w3,b3."""
    B, in_size = x.shape
    hidden = params["w1"].shape[1]
    highdim = params["w3"].shape[1]

    if batch_tile is None:
        batch_tile = _choose_batch_tile(B)
    batch_tile = max(8, _round_up(batch_tile, 8))

    B_pad = _round_up(max(B, batch_tile), batch_tile)
    highdim_pad = _round_up(highdim, 128)  # lane-dense output (unmasked stores)

    # bf16 inputs to the MXU; biases (and all elementwise work) stay f32.
    x_p = jnp.pad(x, ((0, B_pad - B), (0, 0))).astype(jnp.bfloat16)
    w1 = params["w1"].astype(jnp.bfloat16)
    w2 = params["w2"].astype(jnp.bfloat16)
    w3 = jnp.pad(params["w3"],
                 ((0, 0), (0, highdim_pad - highdim))).astype(jnp.bfloat16)
    b1 = params["b1"].reshape(1, hidden).astype(jnp.float32)
    b2 = params["b2"].reshape(1, hidden).astype(jnp.float32)
    b3 = jnp.pad(params["b3"],
                 ((0, highdim_pad - highdim),)).reshape(1, highdim_pad).astype(jnp.float32)

    grid = (B_pad // batch_tile,)

    # VMEM budget: double-buffered x/out tiles + (buffered) resident weights.
    needed = (2 * batch_tile * in_size * 2            # x tiles (bf16)
              + 2 * batch_tile * highdim_pad * 4      # out tiles (f32)
              + 2 * (w1.size + w2.size + w3.size) * 2
              + 2 * (b1.size + b2.size + b3.size) * 4)
    vmem_limit = int(min(100 * 1024 * 1024,
                         max(needed * 3 // 2 + (4 << 20), 32 << 20)))

    flops = 2 * B_pad * (in_size * hidden + hidden * hidden + hidden * highdim_pad)
    bytes_accessed = (x_p.size * 2 + (w1.size + w2.size + w3.size) * 2
                      + (b1.size + b2.size + b3.size) * 4
                      + B_pad * highdim_pad * 4)
    cost = pl.CostEstimate(flops=flops, transcendentals=0,
                           bytes_accessed=bytes_accessed)

    full = lambda shape: pl.BlockSpec(shape, lambda i: (0, 0))

    out = pl.pallas_call(
        uplift_kernel,
        out_shape=jax.ShapeDtypeStruct((B_pad, highdim_pad), jnp.float32),
        grid_spec=pltpu.PrefetchScalarGridSpec(
            num_scalar_prefetch=0,
            grid=grid,
            in_specs=[
                pl.BlockSpec((batch_tile, in_size), lambda i: (i, 0)),  # x tile
                full((in_size, hidden)),      # w1 (resident)
                full((1, hidden)),            # b1
                full((hidden, hidden)),       # w2
                full((1, hidden)),            # b2
                full((hidden, highdim_pad)),  # w3 (lane-padded)
                full((1, highdim_pad)),       # b3
            ],
            out_specs=pl.BlockSpec((batch_tile, highdim_pad), lambda i: (i, 0)),
        ),
        compiler_params=pltpu.CompilerParams(
            dimension_semantics=("parallel",),
            vmem_limit_bytes=vmem_limit,
        ),
        cost_estimate=cost,
    )(x_p, w1, b1, w2, b2, w3, b3)

    # Strip batch and lane padding before returning to callers.
    return out[:B, :highdim]


def init_params(key, input_size, hidden_size, highdim_size):
    """Deterministic init mimicking nn.Linear (uniform +/- 1/sqrt(fan_in)).
    Weights stored as (in_features, out_features)."""
    ks = jax.random.split(key, 6)

    def linear(kw, kb, fan_in, fan_out):
        bound = 1.0 / jnp.sqrt(float(fan_in))
        w = jax.random.uniform(kw, (fan_in, fan_out), jnp.float32, -bound, bound)
        b = jax.random.uniform(kb, (fan_out,), jnp.float32, -bound, bound)
        return w, b

    w1, b1 = linear(ks[0], ks[1], input_size, hidden_size)
    w2, b2 = linear(ks[2], ks[3], hidden_size, hidden_size)
    w3, b3 = linear(ks[4], ks[5], hidden_size, highdim_size)
    return {"w1": w1, "b1": b1, "w2": w2, "b2": b2, "w3": w3, "b3": b3}


def reference_forward(x, params):
    h = _leaky_relu(x @ params["w1"] + params["b1"])
    h = _leaky_relu(h @ params["w2"] + params["b2"])
    return h @ params["w3"] + params["b3"]


if __name__ == "__main__":
    key = jax.random.PRNGKey(0)
    k_x, k_p = jax.random.split(key)

    # Small shapes; batch=20 exercises batch padding, highdim=64 exercises the
    # lane-padding (64 -> 128) path.
    batch, input_size, hidden_size, highdim_size = 20, 16, 32, 64
    x = jax.random.normal(k_x, (batch, input_size), jnp.float32)
    params = init_params(k_p, input_size, hidden_size, highdim_size)

    out = jax.block_until_ready(uplift_net_forward(x, params))

    ref = reference_forward(x, params)
    assert out.shape == (batch, highdim_size)
    max_err = float(jnp.max(jnp.abs(out - ref)))
    # bf16 MXU inputs -> compare against f32 reference with loosened tolerance.
    assert jnp.allclose(out, ref, atol=5e-2, rtol=5e-2), f"mismatch vs reference ({max_err})"

    print("KERNEL_OK")
</pallas_src>

<mosaic_0001>
module attributes {stable_mosaic.version = 11 : i64} {
  func.func @uplift_kernel(%arg0: i32, %arg1: memref<16x16xbf16, #tpu.memory_space<vmem>>, %arg2: memref<16x32xbf16, #tpu.memory_space<vmem>>, %arg3: memref<1x32xf32, #tpu.memory_space<vmem>>, %arg4: memref<32x32xbf16, #tpu.memory_space<vmem>>, %arg5: memref<1x32xf32, #tpu.memory_space<vmem>>, %arg6: memref<32x128xbf16, #tpu.memory_space<vmem>>, %arg7: memref<1x128xf32, #tpu.memory_space<vmem>>, %arg8: memref<16x128xf32, #tpu.memory_space<vmem>>) attributes {dimension_semantics = [#tpu.dimension_semantics<parallel>], iteration_bounds = array<i64: 2>, scalar_prefetch = 0 : i64, scratch_operands = 0 : i64, tpu.core_type = #tpu.core_type<tc>, window_params = [{transform_indices = @transform_0, window_bounds = array<i64: 16, 16>}, {pipeline_mode = #tpu.pipeline_mode<synchronous>, transform_indices = @transform_1, window_bounds = array<i64: 16, 32>}, {pipeline_mode = #tpu.pipeline_mode<synchronous>, transform_indices = @transform_2, window_bounds = array<i64: 1, 32>}, {pipeline_mode = #tpu.pipeline_mode<synchronous>, transform_indices = @transform_3, window_bounds = array<i64: 32, 32>}, {pipeline_mode = #tpu.pipeline_mode<synchronous>, transform_indices = @transform_4, window_bounds = array<i64: 1, 32>}, {pipeline_mode = #tpu.pipeline_mode<synchronous>, transform_indices = @transform_5, window_bounds = array<i64: 32, 128>}, {pipeline_mode = #tpu.pipeline_mode<synchronous>, transform_indices = @transform_6, window_bounds = array<i64: 1, 128>}, {transform_indices = @transform_7, window_bounds = array<i64: 16, 128>}]} {
    %c0 = arith.constant 0 : index
    %c0_0 = arith.constant 0 : index
    %0 = vector.load %arg1[%c0, %c0_0] : memref<16x16xbf16, #tpu.memory_space<vmem>>, vector<16x16xbf16>
    %c0_1 = arith.constant 0 : index
    %c0_2 = arith.constant 0 : index
    %1 = vector.load %arg2[%c0_1, %c0_2] : memref<16x32xbf16, #tpu.memory_space<vmem>>, vector<16x32xbf16>
    %cst = arith.constant dense<0.000000e+00> : vector<16x32xf32>
    %2 = tpu.matmul %0, %1, %cst {dimension_numbers = #tpu.dot_dimension_numbers<[1], [0], [0], [1], [0, 0, 1, 1], [], []>} : vector<16x16xbf16>, vector<16x32xbf16>, vector<16x32xf32> -> vector<16x32xf32>
    %c0_3 = arith.constant 0 : index
    %c0_4 = arith.constant 0 : index
    %3 = vector.load %arg3[%c0_3, %c0_4] : memref<1x32xf32, #tpu.memory_space<vmem>>, vector<1x32xf32>
    %4 = vector.broadcast %3 : vector<1x32xf32> to vector<16x32xf32>
    %5 = arith.addf %2, %4 : vector<16x32xf32>
    %cst_5 = arith.constant 0.000000e+00 : f32
    %6 = vector.broadcast %cst_5 : f32 to vector<16x32xf32>
    %7 = arith.cmpf oge, %5, %6 : vector<16x32xf32>
    %cst_6 = arith.constant 0.00999999977 : f32
    %8 = vector.broadcast %cst_6 : f32 to vector<16x32xf32>
    %9 = arith.mulf %8, %5 : vector<16x32xf32>
    %10 = arith.select %7, %5, %9 : vector<16x32xi1>, vector<16x32xf32>
    %11 = arith.truncf %10 : vector<16x32xf32> to vector<16x32xbf16>
    %c0_7 = arith.constant 0 : index
    %c0_8 = arith.constant 0 : index
    %12 = vector.load %arg4[%c0_7, %c0_8] : memref<32x32xbf16, #tpu.memory_space<vmem>>, vector<32x32xbf16>
    %cst_9 = arith.constant dense<0.000000e+00> : vector<16x32xf32>
    %13 = tpu.matmul %11, %12, %cst_9 {dimension_numbers = #tpu.dot_dimension_numbers<[1], [0], [0], [1], [0, 0, 1, 1], [], []>} : vector<16x32xbf16>, vector<32x32xbf16>, vector<16x32xf32> -> vector<16x32xf32>
    %c0_10 = arith.constant 0 : index
    %c0_11 = arith.constant 0 : index
    %14 = vector.load %arg5[%c0_10, %c0_11] : memref<1x32xf32, #tpu.memory_space<vmem>>, vector<1x32xf32>
    %15 = vector.broadcast %14 : vector<1x32xf32> to vector<16x32xf32>
    %16 = arith.addf %13, %15 : vector<16x32xf32>
    %cst_12 = arith.constant 0.000000e+00 : f32
    %17 = vector.broadcast %cst_12 : f32 to vector<16x32xf32>
    %18 = arith.cmpf oge, %16, %17 : vector<16x32xf32>
    %cst_13 = arith.constant 0.00999999977 : f32
    %19 = vector.broadcast %cst_13 : f32 to vector<16x32xf32>
    %20 = arith.mulf %19, %16 : vector<16x32xf32>
    %21 = arith.select %18, %16, %20 : vector<16x32xi1>, vector<16x32xf32>
    %22 = arith.truncf %21 : vector<16x32xf32> to vector<16x32xbf16>
    %c0_14 = arith.constant 0 : index
    %c0_15 = arith.constant 0 : index
    %23 = vector.load %arg6[%c0_14, %c0_15] : memref<32x128xbf16, #tpu.memory_space<vmem>>, vector<32x128xbf16>
    %cst_16 = arith.constant dense<0.000000e+00> : vector<16x128xf32>
    %24 = tpu.matmul %22, %23, %cst_16 {dimension_numbers = #tpu.dot_dimension_numbers<[1], [0], [0], [1], [0, 0, 1, 1], [], []>} : vector<16x32xbf16>, vector<32x128xbf16>, vector<16x128xf32> -> vector<16x128xf32>
    %c0_17 = arith.constant 0 : index
    %c0_18 = arith.constant 0 : index
    %25 = vector.load %arg7[%c0_17, %c0_18] : memref<1x128xf32, #tpu.memory_space<vmem>>, vector<1x128xf32>
    %26 = vector.broadcast %25 : vector<1x128xf32> to vector<16x128xf32>
    %27 = arith.addf %24, %26 : vector<16x128xf32>
    %c0_19 = arith.constant 0 : index
    %c0_20 = arith.constant 0 : index
    %28 = vector.load %arg8[%c0_19, %c0_20] : memref<16x128xf32, #tpu.memory_space<vmem>>, vector<16x128xf32>
    tpu.vector_store %arg8[%c0_19, %c0_20], %27 {strides = array<i32>} : memref<16x128xf32, #tpu.memory_space<vmem>>, vector<16x128xf32>,
    return
  }
  func.func @transform_0(%arg0: i32) -> (i32, i32) {
    %c0_i32 = arith.constant 0 : i32
    %c0_i32_0 = arith.constant 0 : i32
    return %arg0, %c0_i32 : i32, i32
  }
  func.func @transform_1(%arg0: i32) -> (i32, i32) {
    %c0_i32 = arith.constant 0 : i32
    %c0_i32_0 = arith.constant 0 : i32
    %c0_i32_1 = arith.constant 0 : i32
    return %c0_i32, %c0_i32_0 : i32, i32
  }
  func.func @transform_2(%arg0: i32) -> (i32, i32) {
    %c0_i32 = arith.constant 0 : i32
    %c0_i32_0 = arith.constant 0 : i32
    %c0_i32_1 = arith.constant 0 : i32
    return %c0_i32, %c0_i32_0 : i32, i32
  }
  func.func @transform_3(%arg0: i32) -> (i32, i32) {
    %c0_i32 = arith.constant 0 : i32
    %c0_i32_0 = arith.constant 0 : i32
    %c0_i32_1 = arith.constant 0 : i32
    return %c0_i32, %c0_i32_0 : i32, i32
  }
  func.func @transform_4(%arg0: i32) -> (i32, i32) {
    %c0_i32 = arith.constant 0 : i32
    %c0_i32_0 = arith.constant 0 : i32
    %c0_i32_1 = arith.constant 0 : i32
    return %c0_i32, %c0_i32_0 : i32, i32
  }
  func.func @transform_5(%arg0: i32) -> (i32, i32) {
    %c0_i32 = arith.constant 0 : i32
    %c0_i32_0 = arith.constant 0 : i32
    %c0_i32_1 = arith.constant 0 : i32
    return %c0_i32, %c0_i32_0 : i32, i32
  }
  func.func @transform_6(%arg0: i32) -> (i32, i32) {
    %c0_i32 = arith.constant 0 : i32
    %c0_i32_0 = arith.constant 0 : i32
    %c0_i32_1 = arith.constant 0 : i32
    return %c0_i32, %c0_i32_0 : i32, i32
  }
  func.func @transform_7(%arg0: i32) -> (i32, i32) {
    %c0_i32 = arith.constant 0 : i32
    %c0_i32_0 = arith.constant 0 : i32
    return %arg0, %c0_i32 : i32, i32
  }
}

</mosaic_0001>

<llo_original>
// kernel: uplift_net_forward.1
$region0: #{uplift_net_forward.1}
  #allocation0 [shape = 'u32[]', space=smem, size = 0x4, offset = 0x4, fixed_abs, tag = 'smem constant byte address 0x4 - core index']
  #allocation1 [shape = 'u32[144,128]{1,0:T(1,128)}', space=vmem, size = 0x12000, scoped, tag = 'internal scratch']
  %s0 = inlined_call_operand.vmem [shape: bf16[32,16], index: 0, kind: input, shape index: {}]
  %s1 = inlined_call_operand.vmem [shape: bf16[16,32], index: 1, kind: input, shape index: {}]
  %s2 = inlined_call_operand.vmem [shape: f32[1,32], index: 2, kind: input, shape index: {}]
  %s3 = inlined_call_operand.vmem [shape: bf16[32,32], index: 3, kind: input, shape index: {}]
  %s4 = inlined_call_operand.vmem [shape: f32[1,32], index: 4, kind: input, shape index: {}]
  %s5 = inlined_call_operand.vmem [shape: bf16[32,128], index: 5, kind: input, shape index: {}]
  %s6 = inlined_call_operand.vmem [shape: f32[1,128], index: 6, kind: input, shape index: {}]
  %s7 = inlined_call_operand.vmem [shape: f32[32,128], index: 7, kind: output, shape index: {}]
  %s8 = sld [smem:[#allocation0]]
  $region61: #{uplift_net_forward.1} parent=0
    _
  %s10 = ssub.s32 1, %s8
  %s11 = scalar_select 0, %s10, %s8
  loop: start=0, step=1, limit=4
  $region2: #{uplift_net_forward.1} parent=0 // loop_pre_header
    _
  $region3: #{uplift_net_forward.1} parent=0 // loop_header
    %s13 = sphi 0, %s17
    %p14 = scmp.ge.s32.totalorder %s13, 4
    %s23 = sphi 0, %s25
    %s26 = sphi 0, %s23
    %s27 = sphi 0, %s26
    %s43 = sphi 0, %s27
    %s47 = sphi 0, %s47
    %s49 = sphi 0, %s47
    %s50 = sphi 0, %s49
    %s64 = sphi 0, %s50
    %s68 = sphi 0, %s68
    %s70 = sphi 0, %s68
    %s71 = sphi 0, %s70
    %s85 = sphi 0, %s71
    %s89 = sphi 0, %s89
    %s91 = sphi 0, %s89
    %s92 = sphi 0, %s91
    %s106 = sphi 0, %s92
    %s110 = sphi 0, %s110
    %s112 = sphi 0, %s110
    %s113 = sphi 0, %s112
    %s127 = sphi 0, %s113
    %s131 = sphi 0, %s131
    %s133 = sphi 0, %s131
    %s134 = sphi 0, %s133
    %s148 = sphi 0, %s134
    %s152 = sphi 0, %s152
    %s154 = sphi 0, %s152
    %s155 = sphi 0, %s154
    %s169 = sphi 0, %s155
    %s175 = sphi 0, %s177
    %s178 = sphi 0, %s175
    %s179 = sphi 0, %s178
    %s195 = sphi 0, %s179
  $region4: #{uplift_net_forward.1} parent=0 // loop_header_branch
    %16 = sbr.rel (%p14) target = $region8
  $region5: #{uplift_net_forward.1} parent=0 // loop_body
    %s18 = ssub.s32 %s13, 1
    %s19 = ssub.s32 %s13, 2
    %s20 = sadd.s32 %s13, 1
    %s21 = ssub.s32 %s13, %s20
    %p22 = scmp.eq.s32.totalorder %s21, 0
    %s24 = sadd.s32 %s23, 1
    %s25 = scalar_select %p22, %s23, %s24
    %p28 = pneg %p22
    %p29 = scmp.eq.s32.totalorder %s13, 1
    %p30 = por %p28, %p29
    %p31 = scmp.ne.s32.totalorder %s23, %s26
    %p32 = scmp.eq.s32.totalorder %s13, 0
    %p33 = por %p31, %p32
    %p34 = scmp.ne.s32.totalorder %s23, %s26
    %p35 = scmp.eq.s32.totalorder %s18, 1
    %p36 = por %p34, %p35
    %p37 = scmp.ne.s32.totalorder %s26, %s27
    %p38 = scmp.eq.s32.totalorder %s18, 0
    %p39 = por %p37, %p38
    %p40 = scmp.ne.s32.totalorder %s26, %s27
    %p41 = scmp.eq.s32.totalorder %s19, 1
    %p42 = por %p40, %p41
    %p44 = scmp.ne.s32.totalorder %s27, %s43
    %p45 = scmp.eq.s32.totalorder %s19, 0
    %p46 = por %p44, %p45
    %s48 = sadd.s32 %s47, 1
    %p51 = scmp.eq.s32.totalorder %s13, 1
    %p52 = scmp.ne.s32.totalorder %s47, %s49
    %p53 = scmp.eq.s32.totalorder %s13, 0
    %p54 = por %p52, %p53
    %p55 = scmp.ne.s32.totalorder %s47, %s49
    %p56 = scmp.eq.s32.totalorder %s18, 1
    %p57 = por %p55, %p56
    %p58 = scmp.ne.s32.totalorder %s49, %s50
    %p59 = scmp.eq.s32.totalorder %s18, 0
    %p60 = por %p58, %p59
    %p61 = scmp.ne.s32.totalorder %s49, %s50
    %p62 = scmp.eq.s32.totalorder %s19, 1
    %p63 = por %p61, %p62
    %p65 = scmp.ne.s32.totalorder %s50, %s64
    %p66 = scmp.eq.s32.totalorder %s19, 0
    %p67 = por %p65, %p66
    %s69 = sadd.s32 %s68, 1
    %p72 = scmp.eq.s32.totalorder %s13, 1
    %p73 = scmp.ne.s32.totalorder %s68, %s70
    %p74 = scmp.eq.s32.totalorder %s13, 0
    %p75 = por %p73, %p74
    %p76 = scmp.ne.s32.totalorder %s68, %s70
    %p77 = scmp.eq.s32.totalorder %s18, 1
    %p78 = por %p76, %p77
    %p79 = scmp.ne.s32.totalorder %s70, %s71
    %p80 = scmp.eq.s32.totalorder %s18, 0
    %p81 = por %p79, %p80
    %p82 = scmp.ne.s32.totalorder %s70, %s71
    %p83 = scmp.eq.s32.totalorder %s19, 1
    %p84 = por %p82, %p83
    %p86 = scmp.ne.s32.totalorder %s71, %s85
    %p87 = scmp.eq.s32.totalorder %s19, 0
    %p88 = por %p86, %p87
    %s90 = sadd.s32 %s89, 1
    %p93 = scmp.eq.s32.totalorder %s13, 1
    %p94 = scmp.ne.s32.totalorder %s89, %s91
    %p95 = scmp.eq.s32.totalorder %s13, 0
    %p96 = por %p94, %p95
    %p97 = scmp.ne.s32.totalorder %s89, %s91
    %p98 = scmp.eq.s32.totalorder %s18, 1
    %p99 = por %p97, %p98
    %p100 = scmp.ne.s32.totalorder %s91, %s92
    %p101 = scmp.eq.s32.totalorder %s18, 0
    %p102 = por %p100, %p101
    %p103 = scmp.ne.s32.totalorder %s91, %s92
    %p104 = scmp.eq.s32.totalorder %s19, 1
    %p105 = por %p103, %p104
    %p107 = scmp.ne.s32.totalorder %s92, %s106
    %p108 = scmp.eq.s32.totalorder %s19, 0
    %p109 = por %p107, %p108
    %s111 = sadd.s32 %s110, 1
    %p114 = scmp.eq.s32.totalorder %s13, 1
    %p115 = scmp.ne.s32.totalorder %s110, %s112
    %p116 = scmp.eq.s32.totalorder %s13, 0
    %p117 = por %p115, %p116
    %p118 = scmp.ne.s32.totalorder %s110, %s112
    %p119 = scmp.eq.s32.totalorder %s18, 1
    %p120 = por %p118, %p119
    %p121 = scmp.ne.s32.totalorder %s112, %s113
    %p122 = scmp.eq.s32.totalorder %s18, 0
    %p123 = por %p121, %p122
    %p124 = scmp.ne.s32.totalorder %s112, %s113
    %p125 = scmp.eq.s32.totalorder %s19, 1
    %p126 = por %p124, %p125
    %p128 = scmp.ne.s32.totalorder %s113, %s127
    %p129 = scmp.eq.s32.totalorder %s19, 0
    %p130 = por %p128, %p129
    %s132 = sadd.s32 %s131, 1
    %p135 = scmp.eq.s32.totalorder %s13, 1
    %p136 = scmp.ne.s32.totalorder %s131, %s133
    %p137 = scmp.eq.s32.totalorder %s13, 0
    %p138 = por %p136, %p137
    %p139 = scmp.ne.s32.totalorder %s131, %s133
    %p140 = scmp.eq.s32.totalorder %s18, 1
    %p141 = por %p139, %p140
    %p142 = scmp.ne.s32.totalorder %s133, %s134
    %p143 = scmp.eq.s32.totalorder %s18, 0
    %p144 = por %p142, %p143
    %p145 = scmp.ne.s32.totalorder %s133, %s134
    %p146 = scmp.eq.s32.totalorder %s19, 1
    %p147 = por %p145, %p146
    %p149 = scmp.ne.s32.totalorder %s134, %s148
    %p150 = scmp.eq.s32.totalorder %s19, 0
    %p151 = por %p149, %p150
    %s153 = sadd.s32 %s152, 1
    %p156 = scmp.eq.s32.totalorder %s13, 1
    %p157 = scmp.ne.s32.totalorder %s152, %s154
    %p158 = scmp.eq.s32.totalorder %s13, 0
    %p159 = por %p157, %p158
    %p160 = scmp.ne.s32.totalorder %s152, %s154
    %p161 = scmp.eq.s32.totalorder %s18, 1
    %p162 = por %p160, %p161
    %p163 = scmp.ne.s32.totalorder %s154, %s155
    %p164 = scmp.eq.s32.totalorder %s18, 0
    %p165 = por %p163, %p164
    %p166 = scmp.ne.s32.totalorder %s154, %s155
    %p167 = scmp.eq.s32.totalorder %s19, 1
    %p168 = por %p166, %p167
    %p170 = scmp.ne.s32.totalorder %s155, %s169
    %p171 = scmp.eq.s32.totalorder %s19, 0
    %p172 = por %p170, %p171
    %s173 = ssub.s32 %s13, %s20
    %p174 = scmp.eq.s32.totalorder %s173, 0
    %s176 = sadd.s32 %s175, 1
    %s177 = scalar_select %p174, %s175, %s176
    %p180 = pneg %p174
    %p181 = scmp.eq.s32.totalorder %s13, 1
    %p182 = por %p180, %p181
    %p183 = scmp.ne.s32.totalorder %s175, %s178
    %p184 = scmp.eq.s32.totalorder %s13, 0
    %p185 = por %p183, %p184
    %p186 = scmp.ne.s32.totalorder %s175, %s178
    %p187 = scmp.eq.s32.totalorder %s18, 1
    %p188 = por %p186, %p187
    %p189 = scmp.ne.s32.totalorder %s178, %s179
    %p190 = scmp.eq.s32.totalorder %s18, 0
    %p191 = por %p189, %p190
    %p192 = scmp.ne.s32.totalorder %s178, %s179
    %p193 = scmp.eq.s32.totalorder %s19, 1
    %p194 = por %p192, %p193
    %p196 = scmp.ne.s32.totalorder %s179, %s195
    %p197 = scmp.eq.s32.totalorder %s19, 0
    %p198 = por %p196, %p197
    %p199 = scmp.le.s32.totalorder 1, %s13
    %p200 = scmp.lt.s32.totalorder %s13, 3
    %p201 = pnand %p199, %p200
    %p202 = pneg %p201
    // Predicated region
    $region9: #{uplift_net_forward.1} parent=5 // pred_check
      _
    $region10: #{uplift_net_forward.1} parent=5 // pred_check_branch
      %204 = sbr.rel (%p201) target = $region12
    $region11: #{uplift_net_forward.1} parent=5 // pred_region
      %s205 = ssub.s32 %s13, 1
      // Predicated region
      $region13: #{uplift_net_forward.1} parent=11 // pred_check
        %p206 = pneg %p60
      $region14: #{uplift_net_forward.1} parent=11 // pred_check_branch
        %208 = sbr.rel (%p206) target = $region16
      $region15: #{uplift_net_forward.1} parent=11 // pred_region
        _
      $region16: #{uplift_net_forward.1} parent=11 // pred_fallthru
        _
      // Predicated region
      $region17: #{uplift_net_forward.1} parent=11 // pred_check
        %p209 = pneg %p81
      $region18: #{uplift_net_forward.1} parent=11 // pred_check_branch
        %211 = sbr.rel (%p209) target = $region20
      $region19: #{uplift_net_forward.1} parent=11 // pred_region
        _
      $region20: #{uplift_net_forward.1} parent=11 // pred_fallthru
        _
      // Predicated region
      $region21: #{uplift_net_forward.1} parent=11 // pred_check
        %p212 = pneg %p102
      $region22: #{uplift_net_forward.1} parent=11 // pred_check_branch
        %214 = sbr.rel (%p212) target = $region24
      $region23: #{uplift_net_forward.1} parent=11 // pred_region
        _
      $region24: #{uplift_net_forward.1} parent=11 // pred_fallthru
        _
      // Predicated region
      $region25: #{uplift_net_forward.1} parent=11 // pred_check
        %p215 = pneg %p123
      $region26: #{uplift_net_forward.1} parent=11 // pred_check_branch
        %217 = sbr.rel (%p215) target = $region28
      $region27: #{uplift_net_forward.1} parent=11 // pred_region
        _
      $region28: #{uplift_net_forward.1} parent=11 // pred_fallthru
        _
      // Predicated region
      $region29: #{uplift_net_forward.1} parent=11 // pred_check
        %p218 = pneg %p144
      $region30: #{uplift_net_forward.1} parent=11 // pred_check_branch
        %220 = sbr.rel (%p218) target = $region32
      $region31: #{uplift_net_forward.1} parent=11 // pred_region
        _
      $region32: #{uplift_net_forward.1} parent=11 // pred_fallthru
        _
      // Predicated region
      $region33: #{uplift_net_forward.1} parent=11 // pred_check
        %p221 = pneg %p165
      $region34: #{uplift_net_forward.1} parent=11 // pred_check_branch
        %223 = sbr.rel (%p221) target = $region36
      $region35: #{uplift_net_forward.1} parent=11 // pred_region
        _
      $region36: #{uplift_net_forward.1} parent=11 // pred_fallthru
        _
    $region12: #{uplift_net_forward.1} parent=5 // pred_fallthru
      _
    %p224 = scmp.lt.s32.totalorder %s13, 2
    // Predicated region
    $region37: #{uplift_net_forward.1} parent=5 // pred_check
      %p225 = pneg %p224
    $region38: #{uplift_net_forward.1} parent=5 // pred_check_branch
      %227 = sbr.rel (%p225) target = $region40
    $region39: #{uplift_net_forward.1} parent=5 // pred_region
      // Predicated region
      $region41: #{uplift_net_forward.1} parent=39 // pred_check
        %p228 = pneg %p33
      $region42: #{uplift_net_forward.1} parent=39 // pred_check_branch
        %230 = sbr.rel (%p228) target = $region44
      $region43: #{uplift_net_forward.1} parent=39 // pred_region
        %s231 = smul.u32 2, %s13
        %p232 = scmp.lt.s32.totalorder %s231, 3
        %s233 = scalar_select %p232, %s231, 3
        %s234 = smul.addr %s233, 4
        %s235 = scalar_lea.vmem %s0, %s234
        %s236 = smul.u32 2, %s13
      $region44: #{uplift_net_forward.1} parent=39 // pred_fallthru
        _
    $region40: #{uplift_net_forward.1} parent=5 // pred_fallthru
      _
    %p237 = scmp.le.s32.totalorder 1, %s13
    %p238 = scmp.lt.s32.totalorder %s13, 3
    %p239 = pnand %p237, %p238
    %p240 = pneg %p239
    // Predicated region
    $region45: #{uplift_net_forward.1} parent=5 // pred_check
      _
    $region46: #{uplift_net_forward.1} parent=5 // pred_check_branch
      %242 = sbr.rel (%p239) target = $region48
    $region47: #{uplift_net_forward.1} parent=5 // pred_region
      %s243 = ssub.s32 %s13, 1
      %s244 = smul.u32 2, %s18
      %p245 = scmp.lt.s32.totalorder %s244, 3
      %s246 = scalar_select %p245, %s244, 3
      %s247 = smul.addr %s246, 4
      %s248 = scalar_lea.vmem %s0, %s247
      %p249 = pneg %p39
      %p250 = pneg %p36
      %p251 = pneg %p60
      %p252 = pneg %p57
      %p253 = pneg %p81
      %p254 = pneg %p78
      %p255 = pneg %p102
      %p256 = pneg %p99
      %p257 = pneg %p123
      %p258 = pneg %p120
      %p259 = pneg %p144
      %p260 = pneg %p141
      %p261 = pneg %p165
      %p262 = pneg %p162
      %p263 = pneg %p191
      %p264 = pneg %p188
      %s265 = smul.u32 2, %s18
      %p266 = scmp.lt.s32.totalorder %s265, 3
      %s267 = scalar_select %p266, %s265, 3
      %s268 = smul.addr %s267, 8
      %s269 = scalar_lea.vmem %s7, %s268
      %s270 = smul.u32 2, %s18
      %p271 = scmp.lt.s32.totalorder %s270, 3
      %s272 = scalar_select %p271, %s270, 3
      %s273 = smul.addr %s272, 4
      %s274 = scalar_lea.vmem %s0, %s273
      %s275 = smul.u32 2, %s18
      %s276 = smul.u32 2, %s18
      %p277 = scmp.lt.s32.totalorder %s276, 3
      %s278 = scalar_select %p277, %s276, 3
      %s279 = smul.addr %s278, 8
      %s280 = scalar_lea.vmem %s7, %s279
      %s281 = smul.u32 2, %s18
      %v283 = vld [vmem:[%s274] sm:$0xf]
      %v284 = vld [vmem:[%s274 + $0x4] sm:$0xf]
      %v285 = vld [vmem:[%s1] sm:$0xf]
      %v286 = vld [vmem:[%s1 + $0x4] sm:$0xf]
      %v287 = vld [vmem:[%s2] sm:$0x1]
      %v289 = vlaneseq
      %v290 = vshrl.u32 %v289, 7
      %v291 = vsub.s32 0, %v290
      %v292 = vrot.slane %v287, %v291
      %v296 = vunpack.c.l.b16 %v283
      %v297 = vunpack.c.l.b16 %v284
      %v298 = vpack.c.b16 %v297, %v296
      %v301 = vunpack.c.l.b16 %v285
      %v302 = vunpack.c.l.b16 %v286
      %v303 = vpack.c.b16 %v302, %v301
      %vm305 = vcmask 130048
      %v307 = vsel %vm305, %v298, 0
      %309 = vmatprep.subr.bf16.mxu0 0
      %310 = vmatpush1.bf16.msra.mxu0 %v303
      %311 = vmatprep.subr.bf16.mxu0 0
      %312 = vmatpush1.bf16.msra.mxu0 0
      %313 = vmatprep.subr.bf16.mxu0 0
      %314 = vmatpush1.bf16.msra.mxu0 0
      %315 = vmatprep.subr.bf16.mxu0 0
      %316 = vmatpush1.bf16.msra.mxu0 0
      %317 = vmatprep.subr.bf16.mxu0 0
      %318 = vmatpush1.bf16.msra.mxu0 0
      %319 = vmatprep.subr.bf16.mxu0 0
      %320 = vmatpush1.bf16.msra.mxu0 0
      %321 = vmatprep.subr.bf16.mxu0 0
      %322 = vmatpush1.bf16.msra.mxu0 0
      %323 = vmatprep.subr.bf16.mxu0 0
      %324 = vmatpush1.bf16.msra.mxu0 0
      %325 = vmatprep.subr.bf16.mxu0 0
      %326 = vmatpush1.bf16.msra.mxu0 0
      %327 = vmatprep.subr.bf16.mxu0 0
      %328 = vmatpush1.bf16.msra.mxu0 0
      %329 = vmatprep.subr.bf16.mxu0 0
      %330 = vmatpush1.bf16.msra.mxu0 0
      %331 = vmatprep.subr.bf16.mxu0 0
      %332 = vmatpush1.bf16.msra.mxu0 0
      %333 = vmatprep.subr.bf16.mxu0 0
      %334 = vmatpush1.bf16.msra.mxu0 0
      %335 = vmatprep.subr.bf16.mxu0 0
      %336 = vmatpush1.bf16.msra.mxu0 0
      %337 = vmatprep.subr.bf16.mxu0 0
      %338 = vmatpush1.bf16.msra.mxu0 0
      %339 = vmatprep.subr.bf16.mxu0 0
      %340 = vmatpush1.bf16.msra.mxu0 0
      %341 = vmatprep.mubr.bf16.mxu0 0
      %342 = vmatmul.mubr.bf16.gmra.mrb[0].mxu0 %v307
      %v343 = vpop.f32.mrb[0].mxu0
      %v344 = vadd.f32 %v292, %v343
      %v345 = vpop.f32.mrb[0].mxu0
      %v346 = vpop.f32.mrb[0].mxu0
      %v347 = vadd.f32 %v292, %v346
      %v348 = vpop.f32.mrb[0].mxu0
      %349 = vdwg.mxu0
      %vm350 = vcmp.ge.f32.partialorder %v344, 0.0
      %vm351 = vcmp.ge.f32.partialorder %v347, 0.0
      %v352 = vmul.f32 %v344, 0.01
      %v353 = vmul.f32 %v347, 0.01
      %v354 = vsel %vm350, %v344, %v352
      %v355 = vsel %vm351, %v347, %v353
      %v356 = vpack.c.bf16 %v355, %v354
      %v357 = vld [vmem:[%s3] sm:$0xf]
      %v358 = vld [vmem:[%s3 + $0x4] sm:$0xf]
      %v359 = vld [vmem:[%s3 + $0x8] sm:$0xf]
      %v360 = vld [vmem:[%s3 + $0xc] sm:$0xf]
      %v361 = vld [vmem:[%s4] sm:$0x1]
      %v363 = vlaneseq
      %v364 = vshrl.u32 %v363, 7
      %v365 = vsub.s32 0, %v364
      %v366 = vrot.slane %v361, %v365
      %v372 = vunpack.c.l.b16 %v357
      %v373 = vunpack.c.l.b16 %v358
      %v374 = vunpack.c.l.b16 %v359
      %v375 = vunpack.c.l.b16 %v360
      %v376 = vpack.c.b16 %v373, %v372
      %v377 = vpack.c.b16 %v375, %v374
      %vm380 = vcmask 261120
      %v382 = vsel %vm380, %v356, 0
      %384 = vmatprep.subr.bf16.mxu0 0
      %385 = vmatpush1.bf16.msra.mxu0 %v376
      %386 = vmatprep.subr.bf16.mxu0 0
      %387 = vmatpush1.bf16.msra.mxu0 %v377
      %388 = vmatprep.subr.bf16.mxu0 0
      %389 = vmatpush1.bf16.msra.mxu0 0
      %390 = vmatprep.subr.bf16.mxu0 0
      %391 = vmatpush1.bf16.msra.mxu0 0
      %392 = vmatprep.subr.bf16.mxu0 0
      %393 = vmatpush1.bf16.msra.mxu0 0
      %394 = vmatprep.subr.bf16.mxu0 0
      %395 = vmatpush1.bf16.msra.mxu0 0
      %396 = vmatprep.subr.bf16.mxu0 0
      %397 = vmatpush1.bf16.msra.mxu0 0
      %398 = vmatprep.subr.bf16.mxu0 0
      %399 = vmatpush1.bf16.msra.mxu0 0
      %400 = vmatprep.subr.bf16.mxu0 0
      %401 = vmatpush1.bf16.msra.mxu0 0
      %402 = vmatprep.subr.bf16.mxu0 0
      %403 = vmatpush1.bf16.msra.mxu0 0
      %404 = vmatprep.subr.bf16.mxu0 0
      %405 = vmatpush1.bf16.msra.mxu0 0
      %406 = vmatprep.subr.bf16.mxu0 0
      %407 = vmatpush1.bf16.msra.mxu0 0
      %408 = vmatprep.subr.bf16.mxu0 0
      %409 = vmatpush1.bf16.msra.mxu0 0
      %410 = vmatprep.subr.bf16.mxu0 0
      %411 = vmatpush1.bf16.msra.mxu0 0
      %412 = vmatprep.subr.bf16.mxu0 0
      %413 = vmatpush1.bf16.msra.mxu0 0
      %414 = vmatprep.subr.bf16.mxu0 0
      %415 = vmatpush1.bf16.msra.mxu0 0
      %416 = vmatprep.mubr.bf16.mxu0 0
      %417 = vmatmul.mubr.bf16.gmra.mrb[0].mxu0 %v382
      %v418 = vpop.f32.mrb[0].mxu0
      %v419 = vadd.f32 %v366, %v418
      %v420 = vpop.f32.mrb[0].mxu0
      %v421 = vpop.f32.mrb[0].mxu0
      %v422 = vadd.f32 %v366, %v421
      %v423 = vpop.f32.mrb[0].mxu0
      %424 = vdwg.mxu0
      %vm425 = vcmp.ge.f32.partialorder %v419, 0.0
      %vm426 = vcmp.ge.f32.partialorder %v422, 0.0
      %v427 = vmul.f32 %v419, 0.01
      %v428 = vmul.f32 %v422, 0.01
      %v429 = vsel %vm425, %v419, %v427
      %v430 = vsel %vm426, %v422, %v428
      %v431 = vpack.c.bf16 %v430, %v429
      %v432 = vld [vmem:[%s5] sm:$0xf]
      %v433 = vld [vmem:[%s5 + $0x4] sm:$0xf]
      %v434 = vld [vmem:[%s5 + $0x8] sm:$0xf]
      %v435 = vld [vmem:[%s5 + $0xc] sm:$0xf]
      %v436 = vld [vmem:[%s6] sm:$0x1]
      %v438 = vlaneseq
      %v439 = vshrl.u32 %v438, 7
      %v440 = vsub.s32 0, %v439
      %v441 = vrot.slane %v436, %v440
      %v447 = vunpack.c.l.b16 %v432
      %v448 = vunpack.c.l.b16 %v433
      %v449 = vunpack.c.l.b16 %v434
      %v450 = vunpack.c.l.b16 %v435
      %v451 = vpack.c.b16 %v448, %v447
      %v452 = vpack.c.b16 %v450, %v449
      %v456 = vsel %vm380, %v431, 0
      %458 = vmatprep.subr.bf16.mxu0 0
      %459 = vmatpush1.bf16.msra.mxu0 %v451
      %460 = vmatprep.subr.bf16.mxu0 0
      %461 = vmatpush1.bf16.msra.mxu0 %v452
      %462 = vmatprep.subr.bf16.mxu0 0
      %463 = vmatpush1.bf16.msra.mxu0 0
      %464 = vmatprep.subr.bf16.mxu0 0
      %465 = vmatpush1.bf16.msra.mxu0 0
      %466 = vmatprep.subr.bf16.mxu0 0
      %467 = vmatpush1.bf16.msra.mxu0 0
      %468 = vmatprep.subr.bf16.mxu0 0
      %469 = vmatpush1.bf16.msra.mxu0 0
      %470 = vmatprep.subr.bf16.mxu0 0
      %471 = vmatpush1.bf16.msra.mxu0 0
      %472 = vmatprep.subr.bf16.mxu0 0
      %473 = vmatpush1.bf16.msra.mxu0 0
      %474 = vmatprep.subr.bf16.mxu0 0
      %475 = vmatpush1.bf16.msra.mxu0 0
      %476 = vmatprep.subr.bf16.mxu0 0
      %477 = vmatpush1.bf16.msra.mxu0 0
      %478 = vmatprep.subr.bf16.mxu0 0
      %479 = vmatpush1.bf16.msra.mxu0 0
      %480 = vmatprep.subr.bf16.mxu0 0
      %481 = vmatpush1.bf16.msra.mxu0 0
      %482 = vmatprep.subr.bf16.mxu0 0
      %483 = vmatpush1.bf16.msra.mxu0 0
      %484 = vmatprep.subr.bf16.mxu0 0
      %485 = vmatpush1.bf16.msra.mxu0 0
      %486 = vmatprep.subr.bf16.mxu0 0
      %487 = vmatpush1.bf16.msra.mxu0 0
      %488 = vmatprep.subr.bf16.mxu0 0
      %489 = vmatpush1.bf16.msra.mxu0 0
      %490 = vmatprep.mubr.bf16.mxu0 0
      %491 = vmatmul.mubr.bf16.gmra.mrb[0].mxu0 %v456
      %v492 = vpop.f32.mrb[0].mxu0
      %v493 = vadd.f32 %v441, %v492
      %v494 = vpop.f32.mrb[0].mxu0
      %v495 = vpop.f32.mrb[0].mxu0
      %v496 = vadd.f32 %v441, %v495
      %v497 = vpop.f32.mrb[0].mxu0
      %498 = vdwg.mxu0
      %499 = vst [vmem:[%s280] sm:$0xff] %v493
      %500 = vst [vmem:[%s280 + $0x8] sm:$0xff] %v496
      %s501 = smul.u32 2, %s18
      %p502 = scmp.lt.s32.totalorder %s501, 3
      %s503 = scalar_select %p502, %s501, 3
      %s504 = smul.addr %s503, 8
      %s505 = scalar_lea.vmem %s7, %s504
      // Predicated region
      $region49: #{uplift_net_forward.1} parent=47 // pred_check
        %p506 = pneg %p188
      $region50: #{uplift_net_forward.1} parent=47 // pred_check_branch
        %508 = sbr.rel (%p506) target = $region52
      $region51: #{uplift_net_forward.1} parent=47 // pred_region
        %s509 = smul.u32 2, %s18
      $region52: #{uplift_net_forward.1} parent=47 // pred_fallthru
        _
    $region48: #{uplift_net_forward.1} parent=5 // pred_fallthru
      _
    %p510 = scmp.le.s32.totalorder 2, %s13
    // Predicated region
    $region53: #{uplift_net_forward.1} parent=5 // pred_check
      %p511 = pneg %p510
    $region54: #{uplift_net_forward.1} parent=5 // pred_check_branch
      %513 = sbr.rel (%p511) target = $region56
    $region55: #{uplift_net_forward.1} parent=5 // pred_region
      %s514 = ssub.s32 %s13, 2
      // Predicated region
      $region57: #{uplift_net_forward.1} parent=55 // pred_check
        %p515 = pneg %p194
      $region58: #{uplift_net_forward.1} parent=55 // pred_check_branch
        %517 = sbr.rel (%p515) target = $region60
      $region59: #{uplift_net_forward.1} parent=55 // pred_region
        %s518 = smul.u32 2, %s19
        %p519 = scmp.lt.s32.totalorder %s518, 3
        %s520 = scalar_select %p519, %s518, 3
        %s521 = smul.addr %s520, 8
        %s522 = scalar_lea.vmem %s7, %s521
      $region60: #{uplift_net_forward.1} parent=55 // pred_fallthru
        _
    $region56: #{uplift_net_forward.1} parent=5 // pred_fallthru
      _
  $region6: #{uplift_net_forward.1} parent=0 // loop_footer
    %s17 = sadd.s32 1, %s13
  $region7: #{uplift_net_forward.1} parent=0 // loop_footer_branch
    %12 = sbr.rel target = $region3
  $region8: #{uplift_net_forward.1} parent=0 // loop_exit
    _

</llo_original>
